<compile_context>
chip_gen: v7x
topology: tpu7x:2x2x1
jax: 0.10.0
libtpu: 0.0.40
codegen_flags: <defaults>
</compile_context>

<pallas_src>
import jax
import jax.numpy as jnp
from jax.experimental import pallas as pl
from jax.experimental.pallas import tpu as pltpu


def _round_up(n, m):
    return ((n + m - 1) // m) * m


def _tft_time_embed_kernel(x_ref, wexp_ref, o_ref):
    # x_ref:    [tm, C]   tile of flattened (batch*seq) rows
    # wexp_ref: [C, tn]   column tile of the block-diagonal expanded weight
    # o_ref:    [tm, tn]  lane-dense output tile
    o_ref[...] = jnp.dot(
        x_ref[...], wexp_ref[...], preferred_element_type=jnp.float32
    ).astype(o_ref.dtype)


def tft_time_feature_embedding(x, weights):
    """x: [B, L, C] float32, weights: [C, D] float32 -> [B, L, C, D] float32."""
    B, L, C = x.shape
    D = weights.shape[1]
    M = B * L
    CD = C * D
    itemsize = jnp.dtype(x.dtype).itemsize

    def lane_pad(n):
        return _round_up(n, 128)

    # --- column tile ----------------------------------------------------------
    # Keep output stores lane-dense (tn % 128 == 0) whenever CD allows it; for odd
    # configs (e.g. freq='t' -> CD not a multiple of 128) fall back to the full width
    # (still correct, just masked partial stores on a small output).
    if CD % 128 == 0:
        tn = min(CD, 2048)
    else:
        tn = CD

    # --- row tile -------------------------------------------------------------
    # Double-buffered input + output tiles; the (tm, C) x block is padded to 128 lanes
    # in VMEM, so it really costs tm * lane_pad(C) * itemsize per buffer.
    bytes_per_row = 2 * (lane_pad(C) + lane_pad(tn)) * itemsize
    vmem_budget = 24 << 20  # conservative: fits v7x (64 MiB physical / 32 MiB scoped)
    max_tm_vmem = max(8, (vmem_budget // bytes_per_row) // 8 * 8)

    # Target ~8 row tiles so prefetch/writeback overlaps compute, while keeping
    # >=512-row (>=256 KiB) tiles which already sit near the HBM roofline.
    tm = _round_up(pl.cdiv(M, 8), 8)
    tm = max(512, min(tm, 2048))
    tm = min(tm, max_tm_vmem, _round_up(M, 8))
    tm = max(8, (tm // 8) * 8)

    # v7x: the parallel row axis shards across the two TensorCores -> prefer an even
    # number of row tiles so neither core idles or carries an extra tile.
    gm = pl.cdiv(M, tm)
    if gm > 1 and gm % 2 == 1:
        gm += 1
        tm = max(8, _round_up(pl.cdiv(M, gm), 8))
        gm = pl.cdiv(M, tm)
    gn = pl.cdiv(CD, tn)

    # --- block-diagonal expanded weight: Wexp[i, i*D:(i+1)*D] = W[i, :] --------
    wexp = (jnp.eye(C, dtype=weights.dtype)[:, :, None] * weights[None, :, :]).reshape(C, CD)

    x_flat = x.reshape(M, C)  # free: contiguous, no copy

    vmem_need = (2 * tm * (lane_pad(C) + lane_pad(tn))
                 + 2 * _round_up(C, 8) * lane_pad(tn)) * itemsize
    vmem_limit = int(min(max(2 * vmem_need + (1 << 20), 16 << 20), 32 << 20))

    cost = pl.CostEstimate(
        flops=2 * M * C * CD,
        transcendentals=0,
        bytes_accessed=(M * C + C * CD + M * CD) * itemsize,
    )

    out_flat = pl.pallas_call(
        _tft_time_embed_kernel,
        out_shape=jax.ShapeDtypeStruct((M, CD), x.dtype),
        grid_spec=pltpu.PrefetchScalarGridSpec(
            num_scalar_prefetch=0,
            grid=(gm, gn),
            in_specs=[
                pl.BlockSpec((tm, C), lambda i, j: (i, 0)),   # x row tile (resident across j)
                pl.BlockSpec((C, tn), lambda i, j: (0, j)),   # tiny weight column tile
            ],
            out_specs=pl.BlockSpec((tm, tn), lambda i, j: (i, j)),  # lane-dense output tile
        ),
        compiler_params=pltpu.CompilerParams(
            dimension_semantics=("parallel", "parallel"),
            vmem_limit_bytes=vmem_limit,
        ),
        cost_estimate=cost,
    )(x_flat, wexp)

    # Free reshape to the PyTorch output layout [B, L, d_inp, d_model] (same memory order).
    return out_flat.reshape(B, L, C, D)


if __name__ == "__main__":
    # Config matching TFTTimeFeatureEmbedding(d_model=32, embed_type='timeF', freq='h') -> d_inp=4
    d_model = 32
    d_inp = 4  # freq_map['h']

    key = jax.random.PRNGKey(0)
    kx, kw, kx2 = jax.random.split(key, 3)

    # W[i, :] corresponds to nn.Linear(1, d_model, bias=False).weight.squeeze(-1) for feature i.
    W = jax.random.normal(kw, (d_inp, d_model), dtype=jnp.float32) * 0.1

    # Test 1: small, rows a multiple of 8.
    B, L = 2, 8
    x = jax.random.normal(kx, (B, L, d_inp), dtype=jnp.float32)
    out = jax.block_until_ready(tft_time_feature_embedding(x, W))
    ref = x[:, :, :, None] * W[None, None, :, :]  # [B, L, d_inp, d_model]
    assert out.shape == (B, L, d_inp, d_model), out.shape
    assert jnp.allclose(out, ref, atol=1e-6, rtol=1e-6)

    # Test 2: row count not a multiple of 8 -> exercises the ragged-boundary (masked) block.
    B2, L2 = 3, 7
    x2 = jax.random.normal(kx2, (B2, L2, d_inp), dtype=jnp.float32)
    out2 = jax.block_until_ready(tft_time_feature_embedding(x2, W))
    ref2 = x2[:, :, :, None] * W[None, None, :, :]
    assert out2.shape == (B2, L2, d_inp, d_model), out2.shape
    assert jnp.allclose(out2, ref2, atol=1e-6, rtol=1e-6)

    print("KERNEL_OK")
</pallas_src>

<mosaic_0001>
module attributes {stable_mosaic.version = 11 : i64} {
  func.func @_tft_time_embed_kernel(%arg0: i32, %arg1: i32, %arg2: memref<16x4xf32, #tpu.memory_space<vmem>>, %arg3: memref<4x128xf32, #tpu.memory_space<vmem>>, %arg4: memref<16x128xf32, #tpu.memory_space<vmem>>) attributes {dimension_semantics = [#tpu.dimension_semantics<parallel>, #tpu.dimension_semantics<parallel>], iteration_bounds = array<i64: 1, 1>, scalar_prefetch = 0 : i64, scratch_operands = 0 : i64, tpu.core_type = #tpu.core_type<tc>, window_params = [{transform_indices = @transform_0, window_bounds = array<i64: 16, 4>}, {transform_indices = @transform_1, window_bounds = array<i64: 4, 128>}, {transform_indices = @transform_2, window_bounds = array<i64: 16, 128>}]} {
    %c0 = arith.constant 0 : index
    %c0_0 = arith.constant 0 : index
    %0 = vector.load %arg2[%c0, %c0_0] : memref<16x4xf32, #tpu.memory_space<vmem>>, vector<16x4xf32>
    %c0_1 = arith.constant 0 : index
    %c0_2 = arith.constant 0 : index
    %1 = vector.load %arg3[%c0_1, %c0_2] : memref<4x128xf32, #tpu.memory_space<vmem>>, vector<4x128xf32>
    %cst = arith.constant dense<0.000000e+00> : vector<16x128xf32>
    %2 = tpu.matmul %0, %1, %cst {dimension_numbers = #tpu.dot_dimension_numbers<[1], [0], [0], [1], [0, 0, 1, 1], [], []>} : vector<16x4xf32>, vector<4x128xf32>, vector<16x128xf32> -> vector<16x128xf32>
    %c0_3 = arith.constant 0 : index
    %c0_4 = arith.constant 0 : index
    %3 = vector.load %arg4[%c0_3, %c0_4] : memref<16x128xf32, #tpu.memory_space<vmem>>, vector<16x128xf32>
    tpu.vector_store %arg4[%c0_3, %c0_4], %2 {strides = array<i32>} : memref<16x128xf32, #tpu.memory_space<vmem>>, vector<16x128xf32>,
    return
  }
  func.func @transform_0(%arg0: i32, %arg1: i32) -> (i32, i32) {
    %c0_i32 = arith.constant 0 : i32
    %c0_i32_0 = arith.constant 0 : i32
    return %arg0, %c0_i32 : i32, i32
  }
  func.func @transform_1(%arg0: i32, %arg1: i32) -> (i32, i32) {
    %c0_i32 = arith.constant 0 : i32
    %c0_i32_0 = arith.constant 0 : i32
    return %c0_i32, %arg1 : i32, i32
  }
  func.func @transform_2(%arg0: i32, %arg1: i32) -> (i32, i32) {
    %c0_i32 = arith.constant 0 : i32
    return %arg0, %arg1 : i32, i32
  }
}

</mosaic_0001>

<llo_original>
// kernel: tpu_custom_call.1
$region0: #{tpu_custom_call.1}
  #allocation0 [shape = 'u32[]', space=smem, size = 0x4, offset = 0x4, fixed_abs, tag = 'smem constant byte address 0x4 - core index']
  #allocation1 [shape = 'u32[144,128]{1,0:T(1,128)}', space=vmem, size = 0x12000, scoped, tag = 'internal scratch']
  %s0 = inlined_call_operand.vmem [shape: f32[16,4], index: 0, kind: input, shape index: {}]
  %s1 = inlined_call_operand.vmem [shape: f32[4,128], index: 1, kind: input, shape index: {}]
  %s2 = inlined_call_operand.hbm [shape: f32[16,128], index: 2, kind: output, shape index: {}]
  %s3 = sld [smem:[#allocation0]]
  $region18: #{tpu_custom_call.1} parent=0
    _
  %s5 = ssub.s32 1, %s3
  %s6 = scalar_select 0, %s5, %s3
  $region1: #{tpu_custom_call.1} parent=0
    #allocation2 [shape = 'u8[8192]{0}', space=vmem, size = 0x2000, scoped, tag = 'output window, operand 0, single buffered']
    #allocation3 [shape = 's32[1]{0}', space=sflag, size = 0x4, scoped, tag = 'scoped memory for tpu_custom_call.1']
    %7 = vsyncpa [#allocation3], 0
    // Predicated region
    $region2: #{tpu_custom_call.1} parent=1 // pred_check
      _
    $region3: #{tpu_custom_call.1} parent=1 // pred_check_branch
      %9 = sbr.rel (0) target = $region5
    $region4: #{tpu_custom_call.1} parent=1 // pred_region
      _
    $region5: #{tpu_custom_call.1} parent=1 // pred_fallthru
      _
    // Predicated region
    $region6: #{tpu_custom_call.1} parent=1 // pred_check
      _
    $region7: #{tpu_custom_call.1} parent=1 // pred_check_branch
      %11 = sbr.rel (0) target = $region9
    $region8: #{tpu_custom_call.1} parent=1 // pred_region
      _
    $region9: #{tpu_custom_call.1} parent=1 // pred_fallthru
      _
    %v12 = vld [vmem:[%s0] sm:$0xff]
    %v13 = vld [vmem:[%s0 + $0x8] sm:$0xff]
    %v14 = vld [vmem:[%s1] sm:$0xf]
    %vm15 = vcmask 31744
    %v17 = vsel %vm15, %v12, 0
    %v20 = vsel %vm15, %v13, 0
    %vm22 = vcmask 1043456
    %v24 = vsel %vm22, %v14, 0
    %26 = vmatprep.subr.mxu0 0.0
    %27 = vmatpush1.msra.mxu0 %v24
    %28 = vmatprep.subr.mxu0 0.0
    %29 = vmatpush1.msra.mxu0 0.0
    %30 = vmatprep.subr.mxu0 0.0
    %31 = vmatpush1.msra.mxu0 0.0
    %32 = vmatprep.subr.mxu0 0.0
    %33 = vmatpush1.msra.mxu0 0.0
    %34 = vmatprep.subr.mxu0 0.0
    %35 = vmatpush1.msra.mxu0 0.0
    %36 = vmatprep.subr.mxu0 0.0
    %37 = vmatpush1.msra.mxu0 0.0
    %38 = vmatprep.subr.mxu0 0.0
    %39 = vmatpush1.msra.mxu0 0.0
    %40 = vmatprep.subr.mxu0 0.0
    %41 = vmatpush1.msra.mxu0 0.0
    %42 = vmatprep.subr.mxu0 0.0
    %43 = vmatpush1.msra.mxu0 0.0
    %44 = vmatprep.subr.mxu0 0.0
    %45 = vmatpush1.msra.mxu0 0.0
    %46 = vmatprep.subr.mxu0 0.0
    %47 = vmatpush1.msra.mxu0 0.0
    %48 = vmatprep.subr.mxu0 0.0
    %49 = vmatpush1.msra.mxu0 0.0
    %50 = vmatprep.subr.mxu0 0.0
    %51 = vmatpush1.msra.mxu0 0.0
    %52 = vmatprep.subr.mxu0 0.0
    %53 = vmatpush1.msra.mxu0 0.0
    %54 = vmatprep.subr.mxu0 0.0
    %55 = vmatpush1.msra.mxu0 0.0
    %56 = vmatprep.subr.mxu0 0.0
    %57 = vmatpush1.msra.mxu0 0.0
    %58 = vmatprep.subr.mxu0 0.0
    %59 = vmatpush1.msra.mxu0 0.0
    %60 = vmatprep.subr.mxu0 0.0
    %61 = vmatpush1.msra.mxu0 0.0
    %62 = vmatprep.subr.mxu0 0.0
    %63 = vmatpush1.msra.mxu0 0.0
    %64 = vmatprep.subr.mxu0 0.0
    %65 = vmatpush1.msra.mxu0 0.0
    %66 = vmatprep.subr.mxu0 0.0
    %67 = vmatpush1.msra.mxu0 0.0
    %68 = vmatprep.subr.mxu0 0.0
    %69 = vmatpush1.msra.mxu0 0.0
    %70 = vmatprep.subr.mxu0 0.0
    %71 = vmatpush1.msra.mxu0 0.0
    %72 = vmatprep.subr.mxu0 0.0
    %73 = vmatpush1.msra.mxu0 0.0
    %74 = vmatprep.subr.mxu0 0.0
    %75 = vmatpush1.msra.mxu0 0.0
    %76 = vmatprep.subr.mxu0 0.0
    %77 = vmatpush1.msra.mxu0 0.0
    %78 = vmatprep.subr.mxu0 0.0
    %79 = vmatpush1.msra.mxu0 0.0
    %80 = vmatprep.subr.mxu0 0.0
    %81 = vmatpush1.msra.mxu0 0.0
    %82 = vmatprep.subr.mxu0 0.0
    %83 = vmatpush1.msra.mxu0 0.0
    %84 = vmatprep.subr.mxu0 0.0
    %85 = vmatpush1.msra.mxu0 0.0
    %86 = vmatprep.subr.mxu0 0.0
    %87 = vmatpush1.msra.mxu0 0.0
    %88 = vmatprep.subr.mxu0 0.0
    %89 = vmatpush1.msra.mxu0 0.0
    %90 = vmatprep.mubr.f32.mxu0 0.0
    %91 = vmatmul.mubr.f32.gmra.mrb[0].mxu0 %v17
    %v92 = vpop.f32.mrb[0].mxu0
    %v93 = vadd.f32 0.0, %v92
    %v94 = vpop.f32.mrb[0].mxu0
    %95 = vmatprep.mubr.f32.mxu0 0.0
    %96 = vmatmul.mubr.f32.gmra.mrb[0].mxu0 %v20
    %v97 = vpop.f32.mrb[0].mxu0
    %v98 = vadd.f32 0.0, %v97
    %v99 = vpop.f32.mrb[0].mxu0
    %100 = vdwg.mxu0
    %101 = vst [vmem:[#allocation2] sm:$0xff] %v93
    %102 = vst [vmem:[#allocation2 + $0x8] sm:$0xff] %v98
    // Predicated region
    $region10: #{tpu_custom_call.1} parent=1 // pred_check
      _
    $region11: #{tpu_custom_call.1} parent=1 // pred_check_branch
      %104 = sbr.rel (0) target = $region13
    $region12: #{tpu_custom_call.1} parent=1 // pred_region
      %s106 = ssub.s32 256, 256
      %107 = vsyncadd [#allocation3], %s106
      %s108 = sshll.u32 [#allocation2], 4
      %s109 = int_to_ptr.vmem [resolvable:$true] %s108
      %114 = dma.vmem_to_hbm [thread:$0]  %s109, 256, %s2, [#allocation3], 128, 128, 8
    $region13: #{tpu_custom_call.1} parent=1 // pred_fallthru
      _
    // Predicated region
    $region14: #{tpu_custom_call.1} parent=1 // pred_check
      _
    $region15: #{tpu_custom_call.1} parent=1 // pred_check_branch
      %116 = sbr.rel (0) target = $region17
    $region16: #{tpu_custom_call.1} parent=1 // pred_region
      %117 = dma.done [#allocation3], 256
    $region17: #{tpu_custom_call.1} parent=1 // pred_fallthru
      _
    %118 = vsyncpa [#allocation3], 1

</llo_original>
